<compile_context>
chip_gen: v5e
topology: v5e:2x2
jax: 0.10.0
libtpu: 0.0.40
codegen_flags: <defaults>
</compile_context>

<pallas_src>
import functools

import jax
import jax.numpy as jnp
from jax.experimental import pallas as pl
from jax.experimental.pallas import tpu as pltpu

IGNORE_INDEX = 255
LANE = 128


def _ce_kernel(pred_ref, lab_ref, out_ref):
    """Softmax CE partial sums for one (batch, pixel-tile) block.

    pred_ref: (1, C, TS, 128) logits (f32 or bf16)
    lab_ref : (1, TS, 128)   int8 labels, ignore encoded as -1
    out_ref : (1, 2, 8, 128) f32; [0,0]=loss partials, [0,1]=count partials,
              accumulated across the innermost ("arbitrary") grid axis.
    """
    t = pl.program_id(2)

    @pl.when(t == 0)
    def _():
        out_ref[...] = jnp.zeros_like(out_ref)

    num_classes = pred_ref.shape[1]
    ts = pred_ref.shape[2]

    # Per-class slabs; upcast to f32 in-kernel (hidden under DMA).
    logits = [pred_ref[0, c].astype(jnp.float32) for c in range(num_classes)]
    lab = lab_ref[0].astype(jnp.int32)                         # (TS, 128)

    # Class-axis reductions as unrolled elementwise (VALU/EUP) ops.
    m = logits[0]
    for c in range(1, num_classes):
        m = jnp.maximum(m, logits[c])

    s = jnp.exp(logits[0] - m)
    correct = jnp.where(lab == 0, logits[0], 0.0)
    for c in range(1, num_classes):
        s = s + jnp.exp(logits[c] - m)
        correct = correct + jnp.where(lab == c, logits[c], 0.0)

    lse = m + jnp.log(s)                                       # (TS, 128)
    valid = lab >= 0
    per_pix = jnp.where(valid, lse - correct, 0.0)             # (TS, 128)

    # Partial reduce to (8,128): elementwise adds across TS//8 aligned slabs
    # (no per-step cross-lane reduce; final reduce happens in the wrapper).
    loss_part = jnp.sum(per_pix.reshape(ts // 8, 8, LANE), axis=0)
    cnt_part = jnp.sum(valid.astype(jnp.float32).reshape(ts // 8, 8, LANE),
                       axis=0)

    out_ref[0, 0] = out_ref[0, 0] + loss_part
    out_ref[0, 1] = out_ref[0, 1] + cnt_part


def _round_up(x, m):
    return (x + m - 1) // m * m


@functools.partial(jax.jit, static_argnames=("tile_rows",))
def _ce_sum_over_batch(prediction, class_label, tile_rows=256):
    """sum_b CrossEntropyLoss(pred[b:b+1], label[b:b+1]) with ignore_index=255.

    tile_rows: sublane rows (of 128 px) per grid step; 256 -> 32768 px / step
               (~512 KiB pred block at C=4 f32). Bias larger (e.g. 512) on v7x.
    """
    N, C, H, W = prediction.shape
    HW = H * W

    # ----- tiling: TS sublane-rows of 128 pixels per grid step ---------------
    p_raw = pl.cdiv(HW, LANE)
    # TS multiple of 32 satisfies int8 (32,128) / bf16 (16,128) / f32 (8,128).
    ts = min(tile_rows, _round_up(p_raw, 32))
    p = _round_up(p_raw, ts)
    hw_pad = p * LANE

    num_tiles = p // ts
    # 2-way parallel split of the tile axis (keeps both v7x TCs busy for small N).
    t_outer = 2 if (num_tiles >= 2 and num_tiles % 2 == 0) else 1
    t_inner = num_tiles // t_outer

    # ----- re-layout inputs (free reshapes when HW % (ts*128) == 0) ----------
    pred_flat = prediction.reshape(N, C, HW)
    if hw_pad != HW:
        pred_flat = jnp.pad(pred_flat, ((0, 0), (0, 0), (0, hw_pad - HW)))
    pred4 = pred_flat.reshape(N, C, p, LANE)

    lab_flat = class_label.reshape(N, HW).astype(jnp.int32)
    lab_flat = jnp.where(lab_flat == IGNORE_INDEX, -1, lab_flat).astype(jnp.int8)
    if hw_pad != HW:
        lab_flat = jnp.pad(lab_flat, ((0, 0), (0, hw_pad - HW)),
                           constant_values=jnp.int8(-1))
    lab3 = lab_flat.reshape(N, p, LANE)

    out = pl.pallas_call(
        _ce_kernel,
        out_shape=jax.ShapeDtypeStruct((N * t_outer, 2, 8, LANE), jnp.float32),
        grid_spec=pltpu.PrefetchScalarGridSpec(
            num_scalar_prefetch=0,
            grid=(N, t_outer, t_inner),
            in_specs=[
                pl.BlockSpec((1, C, ts, LANE),
                             lambda b, o, t: (b, 0, o * t_inner + t, 0)),
                pl.BlockSpec((1, ts, LANE),
                             lambda b, o, t: (b, o * t_inner + t, 0)),
            ],
            out_specs=pl.BlockSpec((1, 2, 8, LANE),
                                   lambda b, o, t: (b * t_outer + o, 0, 0, 0)),
        ),
        compiler_params=pltpu.CompilerParams(
            dimension_semantics=("parallel", "parallel", "arbitrary")
        ),
    )(pred4, lab3)

    out = out.reshape(N, t_outer, 2, 8, LANE)
    sums = jnp.sum(out[:, :, 0], axis=(1, 2, 3))    # (N,) summed pixel losses
    cnts = jnp.sum(out[:, :, 1], axis=(1, 2, 3))    # (N,) valid-pixel counts
    # Direct division matches PyTorch: a sample with all pixels ignored -> NaN.
    per_batch_mean = sums / cnts
    return jnp.sum(per_batch_mean)


def criterion_forward(prediction, embedding, class_label):
    """Mirrors Criterion.forward (iou=False path).

    prediction : (N, 4, H, W) float logits
    embedding  : (N, 32, H, W) decoder features (unused: halo loss omitted)
    class_label: (N, H, W) int labels in {0..3, 255}
    """
    del embedding  # TODO(synk): used only by the undefined HaloCosineEmbeddingLoss
    # Halo terms (1*halo1 + 10*halo2) omitted (see TODO above).
    # The original `+ prediction.sum() * 0` is mathematically zero and dropped
    # (it would force an extra full HBM pass over `prediction`).
    return _ce_sum_over_batch(prediction, class_label)


def _ce_reference(prediction, class_label):
    """Plain-JAX reference: per-sample mean CE (ignore_index=255) summed over batch."""
    N, C, H, W = prediction.shape
    total = jnp.float32(0.0)
    for b in range(N):
        logits = prediction[b].astype(jnp.float32)            # (C, H, W)
        lab = class_label[b].astype(jnp.int32)                # (H, W)
        lse = jax.scipy.special.logsumexp(logits, axis=0)     # (H, W)
        lab_safe = jnp.clip(lab, 0, C - 1)
        corr = jnp.take_along_axis(logits, lab_safe[None], axis=0)[0]
        valid = lab != IGNORE_INDEX
        losses = jnp.where(valid, lse - corr, 0.0)
        total = total + jnp.sum(losses) / jnp.sum(valid.astype(jnp.float32))
    return total


if __name__ == "__main__":
    key = jax.random.PRNGKey(0)
    k1, k2, k3, k4 = jax.random.split(key, 4)

    N, C, H, W = 2, 4, 16, 16
    EMB_C = 32

    prediction = jax.random.normal(k1, (N, C, H, W), dtype=jnp.float32)
    embedding = jax.random.normal(k2, (N, EMB_C, H, W), dtype=jnp.float32)

    class_label = jax.random.randint(k3, (N, H, W), 0, C, dtype=jnp.int32)
    # sprinkle in some ignore_index pixels to exercise masking
    ignore_mask = jax.random.uniform(k4, (N, H, W)) < 0.1
    class_label = jnp.where(ignore_mask, IGNORE_INDEX, class_label)

    loss = criterion_forward(prediction, embedding, class_label)
    loss = jax.block_until_ready(loss)

    ref = _ce_reference(prediction, class_label)
    assert jnp.allclose(loss, ref, rtol=1e-5, atol=1e-5), (loss, ref)

    print("KERNEL_OK")
</pallas_src>

<mosaic_0001>
module attributes {stable_mosaic.version = 11 : i64} {
  func.func @_ce_kernel(%arg0: i32, %arg1: i32, %arg2: i32, %arg3: memref<1x4x32x128xf32, #tpu.memory_space<vmem>>, %arg4: memref<1x32x128xi8, #tpu.memory_space<vmem>>, %arg5: memref<1x2x8x128xf32, #tpu.memory_space<vmem>>) attributes {dimension_semantics = [#tpu.dimension_semantics<parallel>, #tpu.dimension_semantics<parallel>, #tpu.dimension_semantics<arbitrary>], iteration_bounds = array<i64: 2, 1, 1>, scalar_prefetch = 0 : i64, scratch_operands = 0 : i64, tpu.core_type = #tpu.core_type<tc>, window_params = [{transform_indices = @transform_0, window_bounds = array<i64: 1, 4, 32, 128>}, {transform_indices = @transform_1, window_bounds = array<i64: 1, 32, 128>}, {transform_indices = @transform_2, window_bounds = array<i64: 1, 2, 8, 128>}]} {
    %c0_i32 = arith.constant 0 : i32
    %0 = arith.cmpi eq, %arg2, %c0_i32 : i32
    %1 = arith.extui %0 : i1 to i32
    %c0_i32_0 = arith.constant 0 : i32
    %2 = arith.cmpi ne, %1, %c0_i32_0 : i32
    scf.if %2 {
      %cst_40 = arith.constant 0.000000e+00 : f32
      %72 = vector.broadcast %cst_40 : f32 to vector<1x2x8x128xf32>
      %c0_41 = arith.constant 0 : index
      %c0_42 = arith.constant 0 : index
      %c0_43 = arith.constant 0 : index
      %c0_44 = arith.constant 0 : index
      %73 = vector.load %arg5[%c0_41, %c0_42, %c0_43, %c0_44] : memref<1x2x8x128xf32, #tpu.memory_space<vmem>>, vector<1x2x8x128xf32>
      tpu.vector_store %arg5[%c0_41, %c0_42, %c0_43, %c0_44], %72 {strides = array<i32>} : memref<1x2x8x128xf32, #tpu.memory_space<vmem>>, vector<1x2x8x128xf32>,
    } else {
    }
    %c0 = arith.constant 0 : index
    %c0_1 = arith.constant 0 : index
    %c0_2 = arith.constant 0 : index
    %c0_3 = arith.constant 0 : index
    %3 = vector.load %arg3[%c0, %c0_1, %c0_2, %c0_3] : memref<1x4x32x128xf32, #tpu.memory_space<vmem>>, vector<1x1x32x128xf32>
    %4 = vector.shape_cast %3 : vector<1x1x32x128xf32> to vector<32x128xf32>
    %c0_4 = arith.constant 0 : index
    %c1 = arith.constant 1 : index
    %c0_5 = arith.constant 0 : index
    %c0_6 = arith.constant 0 : index
    %5 = vector.load %arg3[%c0_4, %c1, %c0_5, %c0_6] : memref<1x4x32x128xf32, #tpu.memory_space<vmem>>, vector<1x1x32x128xf32>
    %6 = vector.shape_cast %5 : vector<1x1x32x128xf32> to vector<32x128xf32>
    %c0_7 = arith.constant 0 : index
    %c2 = arith.constant 2 : index
    %c0_8 = arith.constant 0 : index
    %c0_9 = arith.constant 0 : index
    %7 = vector.load %arg3[%c0_7, %c2, %c0_8, %c0_9] : memref<1x4x32x128xf32, #tpu.memory_space<vmem>>, vector<1x1x32x128xf32>
    %8 = vector.shape_cast %7 : vector<1x1x32x128xf32> to vector<32x128xf32>
    %c0_10 = arith.constant 0 : index
    %c3 = arith.constant 3 : index
    %c0_11 = arith.constant 0 : index
    %c0_12 = arith.constant 0 : index
    %9 = vector.load %arg3[%c0_10, %c3, %c0_11, %c0_12] : memref<1x4x32x128xf32, #tpu.memory_space<vmem>>, vector<1x1x32x128xf32>
    %10 = vector.shape_cast %9 : vector<1x1x32x128xf32> to vector<32x128xf32>
    %c0_13 = arith.constant 0 : index
    %c0_14 = arith.constant 0 : index
    %c0_15 = arith.constant 0 : index
    %11 = vector.load %arg4[%c0_13, %c0_14, %c0_15] : memref<1x32x128xi8, #tpu.memory_space<vmem>>, vector<1x32x128xi8>
    %12 = vector.shape_cast %11 : vector<1x32x128xi8> to vector<32x128xi8>
    %13 = arith.extsi %12 : vector<32x128xi8> to vector<32x128xi32>
    %14 = arith.maximumf %4, %6 : vector<32x128xf32>
    %15 = arith.maximumf %14, %8 : vector<32x128xf32>
    %16 = arith.maximumf %15, %10 : vector<32x128xf32>
    %17 = arith.subf %4, %16 : vector<32x128xf32>
    %18 = math.exp %17 : vector<32x128xf32>
    %c0_i32_16 = arith.constant 0 : i32
    %19 = vector.broadcast %c0_i32_16 : i32 to vector<32x128xi32>
    %20 = arith.cmpi eq, %13, %19 : vector<32x128xi32>
    %cst = arith.constant 0.000000e+00 : f32
    %21 = vector.broadcast %cst : f32 to vector<32x128xf32>
    %22 = arith.select %20, %4, %21 : vector<32x128xi1>, vector<32x128xf32>
    %23 = arith.subf %6, %16 : vector<32x128xf32>
    %24 = math.exp %23 : vector<32x128xf32>
    %25 = arith.addf %18, %24 : vector<32x128xf32>
    %c1_i32 = arith.constant 1 : i32
    %26 = vector.broadcast %c1_i32 : i32 to vector<32x128xi32>
    %27 = arith.cmpi eq, %13, %26 : vector<32x128xi32>
    %cst_17 = arith.constant 0.000000e+00 : f32
    %28 = vector.broadcast %cst_17 : f32 to vector<32x128xf32>
    %29 = arith.select %27, %6, %28 : vector<32x128xi1>, vector<32x128xf32>
    %30 = arith.addf %22, %29 : vector<32x128xf32>
    %31 = arith.subf %8, %16 : vector<32x128xf32>
    %32 = math.exp %31 : vector<32x128xf32>
    %33 = arith.addf %25, %32 : vector<32x128xf32>
    %c2_i32 = arith.constant 2 : i32
    %34 = vector.broadcast %c2_i32 : i32 to vector<32x128xi32>
    %35 = arith.cmpi eq, %13, %34 : vector<32x128xi32>
    %cst_18 = arith.constant 0.000000e+00 : f32
    %36 = vector.broadcast %cst_18 : f32 to vector<32x128xf32>
    %37 = arith.select %35, %8, %36 : vector<32x128xi1>, vector<32x128xf32>
    %38 = arith.addf %30, %37 : vector<32x128xf32>
    %39 = arith.subf %10, %16 : vector<32x128xf32>
    %40 = math.exp %39 : vector<32x128xf32>
    %41 = arith.addf %33, %40 : vector<32x128xf32>
    %c3_i32 = arith.constant 3 : i32
    %42 = vector.broadcast %c3_i32 : i32 to vector<32x128xi32>
    %43 = arith.cmpi eq, %13, %42 : vector<32x128xi32>
    %cst_19 = arith.constant 0.000000e+00 : f32
    %44 = vector.broadcast %cst_19 : f32 to vector<32x128xf32>
    %45 = arith.select %43, %10, %44 : vector<32x128xi1>, vector<32x128xf32>
    %46 = arith.addf %38, %45 : vector<32x128xf32>
    %47 = math.log %41 : vector<32x128xf32>
    %48 = arith.addf %16, %47 : vector<32x128xf32>
    %c0_i32_20 = arith.constant 0 : i32
    %49 = vector.broadcast %c0_i32_20 : i32 to vector<32x128xi32>
    %50 = arith.cmpi sge, %13, %49 : vector<32x128xi32>
    %51 = arith.subf %48, %46 : vector<32x128xf32>
    %cst_21 = arith.constant 0.000000e+00 : f32
    %52 = vector.broadcast %cst_21 : f32 to vector<32x128xf32>
    %53 = arith.select %50, %51, %52 : vector<32x128xi1>, vector<32x128xf32>
    %54 = vector.shape_cast %53 : vector<32x128xf32> to vector<4x8x128xf32>
    %cst_22 = arith.constant dense<0.000000e+00> : vector<8x128xf32>
    %55 = vector.multi_reduction <add>, %54, %cst_22 [0] : vector<4x8x128xf32> to vector<8x128xf32>
    %56 = arith.extui %50 : vector<32x128xi1> to vector<32x128xi32>
    %57 = arith.sitofp %56 : vector<32x128xi32> to vector<32x128xf32>
    %58 = vector.shape_cast %57 : vector<32x128xf32> to vector<4x8x128xf32>
    %cst_23 = arith.constant dense<0.000000e+00> : vector<8x128xf32>
    %59 = vector.multi_reduction <add>, %58, %cst_23 [0] : vector<4x8x128xf32> to vector<8x128xf32>
    %c0_24 = arith.constant 0 : index
    %c0_25 = arith.constant 0 : index
    %c0_26 = arith.constant 0 : index
    %c0_27 = arith.constant 0 : index
    %60 = vector.load %arg5[%c0_24, %c0_25, %c0_26, %c0_27] : memref<1x2x8x128xf32, #tpu.memory_space<vmem>>, vector<1x1x8x128xf32>
    %61 = vector.shape_cast %60 : vector<1x1x8x128xf32> to vector<8x128xf32>
    %62 = arith.addf %61, %55 : vector<8x128xf32>
    %c0_28 = arith.constant 0 : index
    %c0_29 = arith.constant 0 : index
    %c0_30 = arith.constant 0 : index
    %c0_31 = arith.constant 0 : index
    %63 = vector.load %arg5[%c0_28, %c0_29, %c0_30, %c0_31] : memref<1x2x8x128xf32, #tpu.memory_space<vmem>>, vector<1x1x8x128xf32>
    %64 = vector.shape_cast %63 : vector<1x1x8x128xf32> to vector<8x128xf32>
    %65 = vector.shape_cast %62 : vector<8x128xf32> to vector<1x1x8x128xf32>
    tpu.vector_store %arg5[%c0_28, %c0_29, %c0_30, %c0_31], %65 {strides = array<i32>} : memref<1x2x8x128xf32, #tpu.memory_space<vmem>>, vector<1x1x8x128xf32>,
    %c0_32 = arith.constant 0 : index
    %c1_33 = arith.constant 1 : index
    %c0_34 = arith.constant 0 : index
    %c0_35 = arith.constant 0 : index
    %66 = vector.load %arg5[%c0_32, %c1_33, %c0_34, %c0_35] : memref<1x2x8x128xf32, #tpu.memory_space<vmem>>, vector<1x1x8x128xf32>
    %67 = vector.shape_cast %66 : vector<1x1x8x128xf32> to vector<8x128xf32>
    %68 = arith.addf %67, %59 : vector<8x128xf32>
    %c0_36 = arith.constant 0 : index
    %c1_37 = arith.constant 1 : index
    %c0_38 = arith.constant 0 : index
    %c0_39 = arith.constant 0 : index
    %69 = vector.load %arg5[%c0_36, %c1_37, %c0_38, %c0_39] : memref<1x2x8x128xf32, #tpu.memory_space<vmem>>, vector<1x1x8x128xf32>
    %70 = vector.shape_cast %69 : vector<1x1x8x128xf32> to vector<8x128xf32>
    %71 = vector.shape_cast %68 : vector<8x128xf32> to vector<1x1x8x128xf32>
    tpu.vector_store %arg5[%c0_36, %c1_37, %c0_38, %c0_39], %71 {strides = array<i32>} : memref<1x2x8x128xf32, #tpu.memory_space<vmem>>, vector<1x1x8x128xf32>,
    return
  }
  func.func @transform_0(%arg0: i32, %arg1: i32, %arg2: i32) -> (i32, i32, i32, i32) {
    %c1_i32 = arith.constant 1 : i32
    %0 = arith.muli %arg1, %c1_i32 : i32
    %1 = arith.addi %0, %arg2 : i32
    %c0_i32 = arith.constant 0 : i32
    %c0_i32_0 = arith.constant 0 : i32
    %c0_i32_1 = arith.constant 0 : i32
    return %arg0, %c0_i32, %1, %c0_i32_0 : i32, i32, i32, i32
  }
  func.func @transform_1(%arg0: i32, %arg1: i32, %arg2: i32) -> (i32, i32, i32) {
    %c1_i32 = arith.constant 1 : i32
    %0 = arith.muli %arg1, %c1_i32 : i32
    %1 = arith.addi %0, %arg2 : i32
    %c0_i32 = arith.constant 0 : i32
    %c0_i32_0 = arith.constant 0 : i32
    return %arg0, %1, %c0_i32 : i32, i32, i32
  }
  func.func @transform_2(%arg0: i32, %arg1: i32, %arg2: i32) -> (i32, i32, i32, i32) {
    %c1_i32 = arith.constant 1 : i32
    %0 = arith.muli %arg0, %c1_i32 : i32
    %1 = arith.addi %0, %arg1 : i32
    %c0_i32 = arith.constant 0 : i32
    %c0_i32_0 = arith.constant 0 : i32
    %c0_i32_1 = arith.constant 0 : i32
    %c0_i32_2 = arith.constant 0 : i32
    return %1, %c0_i32, %c0_i32_0, %c0_i32_1 : i32, i32, i32, i32
  }
}

</mosaic_0001>

<llo_original>
// kernel: _ce_sum_over_batch.1
$region0: #{_ce_sum_over_batch.1}
  #allocation0 [shape = 'u32[]', space=smem, size = 0x4, offset = 0x4, fixed_abs, tag = 'smem constant byte address 0x4 - core index']
  #allocation1 [shape = 'u32[72,128]{1,0:T(1,128)}', space=vmem, size = 0x9000, scoped, tag = 'internal scratch']
  %s0 = inlined_call_operand.vmem [shape: f32[2,4,32,128], index: 0, kind: input, shape index: {}]
  %s1 = inlined_call_operand.vmem [shape: s8[2,32,128], index: 1, kind: input, shape index: {}]
  %s2 = inlined_call_operand.vmem [shape: f32[2,2,8,128], index: 2, kind: output, shape index: {}]
  %s3 = sld [smem:[#allocation0]]
  $region45: #{_ce_sum_over_batch.1} parent=0
    _
  %s5 = ssub.s32 1, %s3
  %s6 = scalar_select 0, %s5, %s3
  loop: start=0, step=1, limit=4
  $region2: #{_ce_sum_over_batch.1} parent=0 // loop_pre_header
    _
  $region3: #{_ce_sum_over_batch.1} parent=0 // loop_header
    %s8 = sphi 0, %s12
    %p9 = scmp.ge.s32.totalorder %s8, 4
    %s15 = sphi 0, %s34
    %s16 = sphi 0, %s30
    %s17 = sphi 0, %s26
    %s18 = sphi 0, %s15
    %s19 = sphi 0, %s16
    %s20 = sphi 0, %s17
    %s21 = sphi 0, %s18
    %s22 = sphi 0, %s19
    %s23 = sphi 0, %s20
    %s41 = sphi 0, %s43
    %s44 = sphi 0, %s41
    %s45 = sphi 0, %s44
    %s61 = sphi 0, %s45
    %s71 = sphi 0, %s73
    %s74 = sphi 0, %s71
    %s75 = sphi 0, %s74
    %s91 = sphi 0, %s75
    %s99 = sphi 0, %s101
    %s102 = sphi 0, %s99
    %s103 = sphi 0, %s102
    %s119 = sphi 0, %s103
  $region4: #{_ce_sum_over_batch.1} parent=0 // loop_header_branch
    %11 = sbr.rel (%p9) target = $region8
  $region5: #{_ce_sum_over_batch.1} parent=0 // loop_body
    %s13 = ssub.s32 %s8, 1
    %s14 = ssub.s32 %s8, 2
    %s24 = sadd.s32 1, %s17
    %p25 = scmp.ge.s32.totalorder %s24, 1
    %s26 = scalar_select %p25, 0, %s24
    %s27 = sadd.s32 1, %s16
    %s28 = scalar_select %p25, %s27, %s16
    %p29 = scmp.ge.s32.totalorder %s28, 1
    %s30 = scalar_select %p29, 0, %s28
    %s31 = sadd.s32 1, %s15
    %s32 = scalar_select %p29, %s31, %s15
    %p33 = scmp.ge.s32.totalorder %s32, 2
    %s34 = scalar_select %p33, 0, %s32
    %s35 = sadd.s32 %s16, %s17
    %s36 = sadd.s32 %s30, %s26
    %s37 = ssub.s32 %s15, %s34
    %s38 = ssub.s32 %s35, %s36
    %s39 = sor.u32 %s37, %s38
    %p40 = scmp.eq.s32.totalorder %s39, 0
    %s42 = sadd.s32 %s41, 1
    %s43 = scalar_select %p40, %s41, %s42
    %p46 = pneg %p40
    %p47 = scmp.eq.s32.totalorder %s8, 1
    %p48 = por %p46, %p47
    %p49 = scmp.ne.s32.totalorder %s41, %s44
    %p50 = scmp.eq.s32.totalorder %s8, 0
    %p51 = por %p49, %p50
    %p52 = scmp.ne.s32.totalorder %s41, %s44
    %p53 = scmp.eq.s32.totalorder %s13, 1
    %p54 = por %p52, %p53
    %p55 = scmp.ne.s32.totalorder %s44, %s45
    %p56 = scmp.eq.s32.totalorder %s13, 0
    %p57 = por %p55, %p56
    %p58 = scmp.ne.s32.totalorder %s44, %s45
    %p59 = scmp.eq.s32.totalorder %s14, 1
    %p60 = por %p58, %p59
    %p62 = scmp.ne.s32.totalorder %s45, %s61
    %p63 = scmp.eq.s32.totalorder %s14, 0
    %p64 = por %p62, %p63
    %s65 = sadd.s32 %s16, %s17
    %s66 = sadd.s32 %s30, %s26
    %s67 = ssub.s32 %s15, %s34
    %s68 = ssub.s32 %s65, %s66
    %s69 = sor.u32 %s67, %s68
    %p70 = scmp.eq.s32.totalorder %s69, 0
    %s72 = sadd.s32 %s71, 1
    %s73 = scalar_select %p70, %s71, %s72
    %p76 = pneg %p70
    %p77 = scmp.eq.s32.totalorder %s8, 1
    %p78 = por %p76, %p77
    %p79 = scmp.ne.s32.totalorder %s71, %s74
    %p80 = scmp.eq.s32.totalorder %s8, 0
    %p81 = por %p79, %p80
    %p82 = scmp.ne.s32.totalorder %s71, %s74
    %p83 = scmp.eq.s32.totalorder %s13, 1
    %p84 = por %p82, %p83
    %p85 = scmp.ne.s32.totalorder %s74, %s75
    %p86 = scmp.eq.s32.totalorder %s13, 0
    %p87 = por %p85, %p86
    %p88 = scmp.ne.s32.totalorder %s74, %s75
    %p89 = scmp.eq.s32.totalorder %s14, 1
    %p90 = por %p88, %p89
    %p92 = scmp.ne.s32.totalorder %s75, %s91
    %p93 = scmp.eq.s32.totalorder %s14, 0
    %p94 = por %p92, %p93
    %s95 = sadd.s32 %s15, %s16
    %s96 = sadd.s32 %s34, %s30
    %s97 = ssub.s32 %s95, %s96
    %p98 = scmp.eq.s32.totalorder %s97, 0
    %s100 = sadd.s32 %s99, 1
    %s101 = scalar_select %p98, %s99, %s100
    %p104 = pneg %p98
    %p105 = scmp.eq.s32.totalorder %s8, 1
    %p106 = por %p104, %p105
    %p107 = scmp.ne.s32.totalorder %s99, %s102
    %p108 = scmp.eq.s32.totalorder %s8, 0
    %p109 = por %p107, %p108
    %p110 = scmp.ne.s32.totalorder %s99, %s102
    %p111 = scmp.eq.s32.totalorder %s13, 1
    %p112 = por %p110, %p111
    %p113 = scmp.ne.s32.totalorder %s102, %s103
    %p114 = scmp.eq.s32.totalorder %s13, 0
    %p115 = por %p113, %p114
    %p116 = scmp.ne.s32.totalorder %s102, %s103
    %p117 = scmp.eq.s32.totalorder %s14, 1
    %p118 = por %p116, %p117
    %p120 = scmp.ne.s32.totalorder %s103, %s119
    %p121 = scmp.eq.s32.totalorder %s14, 0
    %p122 = por %p120, %p121
    %p123 = scmp.le.s32.totalorder 1, %s8
    %p124 = scmp.lt.s32.totalorder %s8, 3
    %p125 = pnand %p123, %p124
    %p126 = pneg %p125
    // Predicated region
    $region9: #{_ce_sum_over_batch.1} parent=5 // pred_check
      _
    $region10: #{_ce_sum_over_batch.1} parent=5 // pred_check_branch
      %128 = sbr.rel (%p125) target = $region12
    $region11: #{_ce_sum_over_batch.1} parent=5 // pred_region
      %s129 = ssub.s32 %s8, 1
    $region12: #{_ce_sum_over_batch.1} parent=5 // pred_fallthru
      _
    %p130 = scmp.lt.s32.totalorder %s8, 2
    // Predicated region
    $region13: #{_ce_sum_over_batch.1} parent=5 // pred_check
      %p131 = pneg %p130
    $region14: #{_ce_sum_over_batch.1} parent=5 // pred_check_branch
      %133 = sbr.rel (%p131) target = $region16
    $region15: #{_ce_sum_over_batch.1} parent=5 // pred_region
      // Predicated region
      $region17: #{_ce_sum_over_batch.1} parent=15 // pred_check
        %p134 = pneg %p51
      $region18: #{_ce_sum_over_batch.1} parent=15 // pred_check_branch
        %136 = sbr.rel (%p134) target = $region20
      $region19: #{_ce_sum_over_batch.1} parent=15 // pred_region
        %s137 = sadd.s32 %s16, %s17
        %s138 = smul.u32 4, %s137
        %p139 = scmp.lt.s32.totalorder %s15, 1
        %s140 = scalar_select %p139, %s15, 1
        %p141 = scmp.lt.s32.totalorder %s138, 3
        %s142 = scalar_select %p141, %s138, 3
        %s143 = smul.addr %s140, 16
        %s144 = sadd.s32 %s142, %s143
        %s145 = smul.addr %s144, 8
        %s146 = scalar_lea.vmem %s0, %s145
        %s147 = sadd.s32 %s16, %s17
        %s148 = smul.u32 4, %s147
      $region20: #{_ce_sum_over_batch.1} parent=15 // pred_fallthru
        _
      // Predicated region
      $region21: #{_ce_sum_over_batch.1} parent=15 // pred_check
        %p149 = pneg %p81
      $region22: #{_ce_sum_over_batch.1} parent=15 // pred_check_branch
        %151 = sbr.rel (%p149) target = $region24
      $region23: #{_ce_sum_over_batch.1} parent=15 // pred_region
        %s152 = sadd.s32 %s16, %s17
        %p153 = scmp.lt.s32.totalorder %s15, 1
        %s154 = scalar_select %p153, %s15, 1
        %p155 = scmp.lt.s32.totalorder %s152, 0
        %s156 = scalar_select %p155, %s152, 0
        %s157 = sadd.s32 %s156, %s154
        %s158 = smul.addr %s157, 8
        %s159 = scalar_lea.vmem %s1, %s158
        %s160 = sadd.s32 %s16, %s17
      $region24: #{_ce_sum_over_batch.1} parent=15 // pred_fallthru
        _
    $region16: #{_ce_sum_over_batch.1} parent=5 // pred_fallthru
      _
    %p161 = scmp.le.s32.totalorder 1, %s8
    %p162 = scmp.lt.s32.totalorder %s8, 3
    %p163 = pnand %p161, %p162
    %p164 = pneg %p163
    // Predicated region
    $region25: #{_ce_sum_over_batch.1} parent=5 // pred_check
      _
    $region26: #{_ce_sum_over_batch.1} parent=5 // pred_check_branch
      %166 = sbr.rel (%p163) target = $region28
    $region27: #{_ce_sum_over_batch.1} parent=5 // pred_region
      %s167 = ssub.s32 %s8, 1
      %s168 = sadd.s32 %s19, %s20
      %s169 = smul.u32 4, %s168
      %p170 = scmp.lt.s32.totalorder %s18, 1
      %s171 = scalar_select %p170, %s18, 1
      %p172 = scmp.lt.s32.totalorder %s169, 3
      %s173 = scalar_select %p172, %s169, 3
      %s174 = smul.addr %s171, 16
      %s175 = sadd.s32 %s173, %s174
      %s176 = smul.addr %s175, 8
      %s177 = scalar_lea.vmem %s0, %s176
      %p178 = pneg %p57
      %p179 = pneg %p54
      %s180 = sadd.s32 %s19, %s20
      %p181 = scmp.lt.s32.totalorder %s18, 1
      %s182 = scalar_select %p181, %s18, 1
      %p183 = scmp.lt.s32.totalorder %s180, 0
      %s184 = scalar_select %p183, %s180, 0
      %s185 = sadd.s32 %s184, %s182
      %s186 = smul.addr %s185, 8
      %s187 = scalar_lea.vmem %s1, %s186
      %p188 = pneg %p87
      %p189 = pneg %p84
      %p190 = pneg %p115
      %p191 = pneg %p112
      %s192 = sadd.s32 %s18, %s19
      %p193 = scmp.lt.s32.totalorder %s192, 1
      %s194 = scalar_select %p193, %s192, 1
      %s195 = smul.addr %s194, 2
      %s196 = smul.addr %s195, 8
      %s197 = scalar_lea.vmem %s2, %s196
      %s198 = sadd.s32 %s19, %s20
      %s199 = smul.u32 4, %s198
      %p200 = scmp.lt.s32.totalorder %s18, 1
      %s201 = scalar_select %p200, %s18, 1
      %p202 = scmp.lt.s32.totalorder %s199, 3
      %s203 = scalar_select %p202, %s199, 3
      %s204 = smul.addr %s201, 16
      %s205 = sadd.s32 %s203, %s204
      %s206 = smul.addr %s205, 8
      %s207 = scalar_lea.vmem %s0, %s206
      %s208 = sadd.s32 %s19, %s20
      %s209 = smul.u32 4, %s208
      %s210 = sadd.s32 %s19, %s20
      %p211 = scmp.lt.s32.totalorder %s18, 1
      %s212 = scalar_select %p211, %s18, 1
      %p213 = scmp.lt.s32.totalorder %s210, 0
      %s214 = scalar_select %p213, %s210, 0
      %s215 = sadd.s32 %s214, %s212
      %s216 = smul.addr %s215, 8
      %s217 = scalar_lea.vmem %s1, %s216
      %s218 = sadd.s32 %s19, %s20
      %s219 = sadd.s32 %s18, %s19
      %p220 = scmp.lt.s32.totalorder %s219, 1
      %s221 = scalar_select %p220, %s219, 1
      %s222 = smul.addr %s221, 2
      %s223 = smul.addr %s222, 8
      %s224 = scalar_lea.vmem %s2, %s223
      %s225 = sadd.s32 %s18, %s19
      %p226 = scmp.eq.s32.totalorder %s20, 0
      // Predicated region
      $region29: #{_ce_sum_over_batch.1} parent=27 // pred_check
        %p227 = pneg %p226
      $region30: #{_ce_sum_over_batch.1} parent=27 // pred_check_branch
        %229 = sbr.rel (%p227) target = $region32
      $region31: #{_ce_sum_over_batch.1} parent=27 // pred_region
        %230 = vst [vmem:[%s224] sm:$0xff] 0.0
        %231 = vst [vmem:[%s224 + $0x8] sm:$0xff] 0.0
      $region32: #{_ce_sum_over_batch.1} parent=27 // pred_fallthru
        _
      %v232 = vld [vmem:[%s207] sm:$0xff]
      %v233 = vld [vmem:[%s207 + $0x8] sm:$0xff]
      %v234 = vld [vmem:[%s207 + $0x10] sm:$0xff]
      %v235 = vld [vmem:[%s207 + $0x18] sm:$0xff]
      %s236 = scalar_lea.vmem %s207, 32
      %v237 = vld [vmem:[%s236] sm:$0xff]
      %v238 = vld [vmem:[%s236 + $0x8] sm:$0xff]
      %v239 = vld [vmem:[%s236 + $0x10] sm:$0xff]
      %v240 = vld [vmem:[%s236 + $0x18] sm:$0xff]
      %s241 = scalar_lea.vmem %s207, 64
      %v242 = vld [vmem:[%s241] sm:$0xff]
      %v243 = vld [vmem:[%s241 + $0x8] sm:$0xff]
      %v244 = vld [vmem:[%s241 + $0x10] sm:$0xff]
      %v245 = vld [vmem:[%s241 + $0x18] sm:$0xff]
      %s246 = scalar_lea.vmem %s207, 96
      %v247 = vld [vmem:[%s246] sm:$0xff]
      %v248 = vld [vmem:[%s246 + $0x8] sm:$0xff]
      %v249 = vld [vmem:[%s246 + $0x10] sm:$0xff]
      %v250 = vld [vmem:[%s246 + $0x18] sm:$0xff]
      %v251 = vld [vmem:[%s217] sm:$0xff]
      %v252 = vunpack.c.0.s8 %v251
      %v253 = vunpack.c.1.s8 %v251
      %v254 = vunpack.c.2.s8 %v251
      %v255 = vunpack.c.3.s8 %v251
      %v256 = vmax.f32 %v232, %v237
      %v257 = vmax.f32 %v233, %v238
      %v258 = vmax.f32 %v234, %v239
      %v259 = vmax.f32 %v235, %v240
      %v260 = vmax.f32 %v256, %v242
      %v261 = vmax.f32 %v257, %v243
      %v262 = vmax.f32 %v258, %v244
      %v263 = vmax.f32 %v259, %v245
      %v264 = vmax.f32 %v260, %v247
      %v265 = vmax.f32 %v261, %v248
      %v266 = vmax.f32 %v262, %v249
      %v267 = vmax.f32 %v263, %v250
      %v268 = vsub.f32 %v232, %v264
      %v269 = vsub.f32 %v233, %v265
      %v270 = vsub.f32 %v234, %v266
      %v271 = vsub.f32 %v235, %v267
      %v272 = vmul.f32 %v268, 1.442695
      %v273 = vpow.pop %v272
      %v274 = vmul.f32 %v269, 1.442695
      %v275 = vpow.pop %v274
      %v276 = vmul.f32 %v270, 1.442695
      %v277 = vpow.pop %v276
      %v278 = vmul.f32 %v271, 1.442695
      %v279 = vpow.pop %v278
      %vm280 = vcmp.eq.s32.totalorder %v252, 0
      %vm281 = vcmp.eq.s32.totalorder %v253, 0
      %vm282 = vcmp.eq.s32.totalorder %v254, 0
      %vm283 = vcmp.eq.s32.totalorder %v255, 0
      %v284 = vsel %vm280, %v232, 0.0
      %v285 = vsel %vm281, %v233, 0.0
      %v286 = vsel %vm282, %v234, 0.0
      %v287 = vsel %vm283, %v235, 0.0
      %v288 = vsub.f32 %v237, %v264
      %v289 = vsub.f32 %v238, %v265
      %v290 = vsub.f32 %v239, %v266
      %v291 = vsub.f32 %v240, %v267
      %v292 = vmul.f32 %v288, 1.442695
      %v293 = vpow.pop %v292
      %v294 = vmul.f32 %v289, 1.442695
      %v295 = vpow.pop %v294
      %v296 = vmul.f32 %v290, 1.442695
      %v297 = vpow.pop %v296
      %v298 = vmul.f32 %v291, 1.442695
      %v299 = vpow.pop %v298
      %v300 = vadd.f32 %v273, %v293
      %v301 = vadd.f32 %v275, %v295
      %v302 = vadd.f32 %v277, %v297
      %v303 = vadd.f32 %v279, %v299
      %vm304 = vcmp.eq.s32.totalorder %v252, 1
      %vm305 = vcmp.eq.s32.totalorder %v253, 1
      %vm306 = vcmp.eq.s32.totalorder %v254, 1
      %vm307 = vcmp.eq.s32.totalorder %v255, 1
      %v308 = vsel %vm304, %v237, 0.0
      %v309 = vsel %vm305, %v238, 0.0
      %v310 = vsel %vm306, %v239, 0.0
      %v311 = vsel %vm307, %v240, 0.0
      %v312 = vadd.f32 %v284, %v308
      %v313 = vadd.f32 %v285, %v309
      %v314 = vadd.f32 %v286, %v310
      %v315 = vadd.f32 %v287, %v311
      %v316 = vsub.f32 %v242, %v264
      %v317 = vsub.f32 %v243, %v265
      %v318 = vsub.f32 %v244, %v266
      %v319 = vsub.f32 %v245, %v267
      %v320 = vmul.f32 %v316, 1.442695
      %v321 = vpow.pop %v320
      %v322 = vmul.f32 %v317, 1.442695
      %v323 = vpow.pop %v322
      %v324 = vmul.f32 %v318, 1.442695
      %v325 = vpow.pop %v324
      %v326 = vmul.f32 %v319, 1.442695
      %v327 = vpow.pop %v326
      %v328 = vadd.f32 %v300, %v321
      %v329 = vadd.f32 %v301, %v323
      %v330 = vadd.f32 %v302, %v325
      %v331 = vadd.f32 %v303, %v327
      %vm332 = vcmp.eq.s32.totalorder %v252, 2
      %vm333 = vcmp.eq.s32.totalorder %v253, 2
      %vm334 = vcmp.eq.s32.totalorder %v254, 2
      %vm335 = vcmp.eq.s32.totalorder %v255, 2
      %v336 = vsel %vm332, %v242, 0.0
      %v337 = vsel %vm333, %v243, 0.0
      %v338 = vsel %vm334, %v244, 0.0
      %v339 = vsel %vm335, %v245, 0.0
      %v340 = vadd.f32 %v312, %v336
      %v341 = vadd.f32 %v313, %v337
      %v342 = vadd.f32 %v314, %v338
      %v343 = vadd.f32 %v315, %v339
      %v344 = vsub.f32 %v247, %v264
      %v345 = vsub.f32 %v248, %v265
      %v346 = vsub.f32 %v249, %v266
      %v347 = vsub.f32 %v250, %v267
      %v348 = vmul.f32 %v344, 1.442695
      %v349 = vpow.pop %v348
      %v350 = vmul.f32 %v345, 1.442695
      %v351 = vpow.pop %v350
      %v352 = vmul.f32 %v346, 1.442695
      %v353 = vpow.pop %v352
      %v354 = vmul.f32 %v347, 1.442695
      %v355 = vpow.pop %v354
      %v356 = vadd.f32 %v328, %v349
      %v357 = vadd.f32 %v329, %v351
      %v358 = vadd.f32 %v330, %v353
      %v359 = vadd.f32 %v331, %v355
      %vm360 = vcmp.eq.s32.totalorder %v252, 3
      %vm361 = vcmp.eq.s32.totalorder %v253, 3
      %vm362 = vcmp.eq.s32.totalorder %v254, 3
      %vm363 = vcmp.eq.s32.totalorder %v255, 3
      %v364 = vsel %vm360, %v247, 0.0
      %v365 = vsel %vm361, %v248, 0.0
      %v366 = vsel %vm362, %v249, 0.0
      %v367 = vsel %vm363, %v250, 0.0
      %v368 = vadd.f32 %v340, %v364
      %v369 = vadd.f32 %v341, %v365
      %v370 = vadd.f32 %v342, %v366
      %v371 = vadd.f32 %v343, %v367
      %v372 = vlog2.pop %v356
      %v373 = vmul.f32 %v372, 0.6931472
      %v374 = vlog2.pop %v357
      %v375 = vmul.f32 %v374, 0.6931472
      %v376 = vlog2.pop %v358
      %v377 = vmul.f32 %v376, 0.6931472
      %v378 = vlog2.pop %v359
      %v379 = vmul.f32 %v378, 0.6931472
      %v380 = vadd.f32 %v264, %v373
      %v381 = vadd.f32 %v265, %v375
      %v382 = vadd.f32 %v266, %v377
      %v383 = vadd.f32 %v267, %v379
      %vm384 = vcmp.ge.s32.totalorder %v252, 0
      %vm385 = vcmp.ge.s32.totalorder %v253, 0
      %vm386 = vcmp.ge.s32.totalorder %v254, 0
      %vm387 = vcmp.ge.s32.totalorder %v255, 0
      %v388 = vsub.f32 %v380, %v368
      %v389 = vsub.f32 %v381, %v369
      %v390 = vsub.f32 %v382, %v370
      %v391 = vsub.f32 %v383, %v371
      %v392 = vsel %vm384, %v388, 0.0
      %v393 = vsel %vm385, %v389, 0.0
      %v394 = vsel %vm386, %v390, 0.0
      %v395 = vsel %vm387, %v391, 0.0
      %v396 = vadd.f32 %v392, %v393
      %v397 = vadd.f32 %v396, %v394
      %v398 = vadd.f32 %v397, %v395
      %v399 = vsel %vm384, 1, 0
      %v400 = vsel %vm385, 1, 0
      %v401 = vsel %vm386, 1, 0
      %v402 = vsel %vm387, 1, 0
      %v403 = vcvt.s32.f32 %v399
      %v404 = vcvt.s32.f32 %v400
      %v405 = vcvt.s32.f32 %v401
      %v406 = vcvt.s32.f32 %v402
      %v407 = vadd.f32 %v403, %v404
      %v408 = vadd.f32 %v407, %v405
      %v409 = vadd.f32 %v408, %v406
      %v410 = vld [vmem:[%s224] sm:$0xff]
      %v411 = vadd.f32 %v410, %v398
      %412 = vst [vmem:[%s224] sm:$0xff] %v411
      %s413 = scalar_lea.vmem %s224, 8
      %v414 = vld [vmem:[%s413] sm:$0xff]
      %v415 = vadd.f32 %v414, %v409
      %416 = vst [vmem:[%s413] sm:$0xff] %v415
      %s417 = sadd.s32 %s18, %s19
      %p418 = scmp.lt.s32.totalorder %s417, 1
      %s419 = scalar_select %p418, %s417, 1
      %s420 = smul.addr %s419, 2
      %s421 = smul.addr %s420, 8
      %s422 = scalar_lea.vmem %s2, %s421
      // Predicated region
      $region33: #{_ce_sum_over_batch.1} parent=27 // pred_check
        %p423 = pneg %p112
      $region34: #{_ce_sum_over_batch.1} parent=27 // pred_check_branch
        %425 = sbr.rel (%p423) target = $region36
      $region35: #{_ce_sum_over_batch.1} parent=27 // pred_region
        %s426 = sadd.s32 %s18, %s19
      $region36: #{_ce_sum_over_batch.1} parent=27 // pred_fallthru
        _
    $region28: #{_ce_sum_over_batch.1} parent=5 // pred_fallthru
      _
    %p427 = scmp.le.s32.totalorder 2, %s8
    // Predicated region
    $region37: #{_ce_sum_over_batch.1} parent=5 // pred_check
      %p428 = pneg %p427
    $region38: #{_ce_sum_over_batch.1} parent=5 // pred_check_branch
      %430 = sbr.rel (%p428) target = $region40
    $region39: #{_ce_sum_over_batch.1} parent=5 // pred_region
      %s431 = ssub.s32 %s8, 2
      // Predicated region
      $region41: #{_ce_sum_over_batch.1} parent=39 // pred_check
        %p432 = pneg %p118
      $region42: #{_ce_sum_over_batch.1} parent=39 // pred_check_branch
        %434 = sbr.rel (%p432) target = $region44
      $region43: #{_ce_sum_over_batch.1} parent=39 // pred_region
        %s435 = sadd.s32 %s21, %s22
        %p436 = scmp.lt.s32.totalorder %s435, 1
        %s437 = scalar_select %p436, %s435, 1
        %s438 = smul.addr %s437, 2
        %s439 = smul.addr %s438, 8
        %s440 = scalar_lea.vmem %s2, %s439
      $region44: #{_ce_sum_over_batch.1} parent=39 // pred_fallthru
        _
    $region40: #{_ce_sum_over_batch.1} parent=5 // pred_fallthru
      _
  $region6: #{_ce_sum_over_batch.1} parent=0 // loop_footer
    %s12 = sadd.s32 1, %s8
  $region7: #{_ce_sum_over_batch.1} parent=0 // loop_footer_branch
    %7 = sbr.rel target = $region3
  $region8: #{_ce_sum_over_batch.1} parent=0 // loop_exit
    _

</llo_original>
